<compile_context>
chip_gen: v7x
topology: tpu7x:2x2x1
jax: 0.10.0
libtpu: 0.0.40
codegen_flags: <defaults>
</compile_context>

<pallas_src>
import numpy as np
import jax
import jax.numpy as jnp
from jax.experimental import pallas as pl


def _identity_kernel(x_ref, o_ref):
    # MockModel.forward(x) == x : single lane-dense VMEM copy of the whole slab.
    o_ref[...] = x_ref[...]


def _identity_2d(x2d):
    rows, lanes = x2d.shape
    return pl.pallas_call(
        _identity_kernel,
        out_shape=jax.ShapeDtypeStruct((rows, lanes), x2d.dtype),
        # One full-array block, no grid: zero per-step overhead, and the
        # full-extent block shape is always layout-legal. Last dim (128) maps
        # to the lane axis -> dense, unmasked vector stores.
        in_specs=[pl.BlockSpec((rows, lanes), lambda: (0, 0))],
        out_specs=pl.BlockSpec((rows, lanes), lambda: (0, 0)),
        # Identity copy: alias the input buffer onto the output.
        input_output_aliases={0: 0},
    )(x2d)


@jax.jit
def mock_model_forward(x):
    """Pallas implementation of MockModel.forward (identity)."""
    orig_shape = x.shape
    lanes = orig_shape[-1]
    rows = x.size // lanes
    # Collapse leading dims so the kernel sees one big lane-dense (rows, lanes)
    # slab instead of many tiny (1, S, H) blocks.
    y2d = _identity_2d(x.reshape(rows, lanes))
    return y2d.reshape(orig_shape)


def init_mock_params(seed=0, num_layers=2, in_features=10, out_features=10):
    """Host-only construction of the nn.Linear(10,10) params created by
    MockModel.__init__ (2 mock layers). forward() never uses them, so they are
    kept as numpy arrays to avoid any device work outside the forward path."""
    rng = np.random.default_rng(seed)
    bound = 1.0 / np.sqrt(in_features)
    return [
        {
            "mlp.weight": rng.uniform(-bound, bound,
                                      (out_features, in_features)).astype(np.float32),
            "mlp.bias": rng.uniform(-bound, bound,
                                    (out_features,)).astype(np.float32),
        }
        for _ in range(num_layers)
    ]
    # TODO(synk): DeviceMesh / tensor-parallel plan application from the test has
    # no single-kernel Pallas equivalent; only the module forward is implemented.


if __name__ == "__main__":
    key = jax.random.PRNGKey(0)

    # Parameters exist (as in __init__) but are never touched by forward().
    _layer_params = init_mock_params()

    # Small deterministic input: batch=2, seq=16, hidden=128 (lane-aligned last dim).
    x = jax.random.normal(key, (2, 16, 128), jnp.float32)

    y = mock_model_forward(x)
    y = jax.block_until_ready(y)

    assert y.shape == x.shape and y.dtype == x.dtype
    assert bool(jnp.all(y == x))  # forward is an exact identity

    print("KERNEL_OK")
</pallas_src>

<mosaic_0001>
module attributes {stable_mosaic.version = 11 : i64} {
  func.func @_identity_kernel(%arg0: memref<32x128xf32, #tpu.memory_space<vmem>>, %arg1: memref<32x128xf32, #tpu.memory_space<vmem>>) attributes {dimension_semantics = [], scalar_prefetch = 0 : i64, scratch_operands = 0 : i64, tpu.core_type = #tpu.core_type<tc>} {
    %c0 = arith.constant 0 : index
    %c0_0 = arith.constant 0 : index
    %0 = vector.load %arg0[%c0, %c0_0] : memref<32x128xf32, #tpu.memory_space<vmem>>, vector<32x128xf32>
    %c0_1 = arith.constant 0 : index
    %c0_2 = arith.constant 0 : index
    %1 = vector.load %arg1[%c0_1, %c0_2] : memref<32x128xf32, #tpu.memory_space<vmem>>, vector<32x128xf32>
    tpu.vector_store %arg1[%c0_1, %c0_2], %0 {strides = array<i32>} : memref<32x128xf32, #tpu.memory_space<vmem>>, vector<32x128xf32>,
    return
  }
}

</mosaic_0001>

<llo_original>
// kernel: mock_model_forward.1
$region0: #{mock_model_forward.1}
  #allocation0 [shape = 'u32[]', space=smem, size = 0x4, offset = 0x4, fixed_abs, tag = 'smem constant byte address 0x4 - core index']
  #allocation1 [shape = 'u32[144,128]{1,0:T(1,128)}', space=vmem, size = 0x12000, scoped, tag = 'internal scratch']
  %s0 = inlined_call_operand.vmem [shape: f32[32,128], index: 0, kind: input, shape index: {}, may-alias: {0,1}]
  %s1 = inlined_call_operand.vmem [shape: f32[32,128], index: 1, kind: output, shape index: {}, may-alias: {0,1}]
  %s2 = sld [smem:[#allocation0]]
  $region14: #{mock_model_forward.1} parent=0
    _
  %s4 = ssub.s32 1, %s2
  %s5 = scalar_select 0, %s4, %s2
  // Predicated region
  $region2: #{mock_model_forward.1} parent=0 // pred_check
    _
  $region3: #{mock_model_forward.1} parent=0 // pred_check_branch
    %7 = sbr.rel (0) target = $region5
  $region4: #{mock_model_forward.1} parent=0 // pred_region
    _
  $region5: #{mock_model_forward.1} parent=0 // pred_fallthru
    _
  %v8 = vld [vmem:[%s0] sm:$0xff]
  %v9 = vld [vmem:[%s0 + $0x8] sm:$0xff]
  %v10 = vld [vmem:[%s0 + $0x10] sm:$0xff]
  %v11 = vld [vmem:[%s0 + $0x18] sm:$0xff]
  %12 = vst [vmem:[%s1] sm:$0xff] %v8
  %13 = vst [vmem:[%s1 + $0x8] sm:$0xff] %v9
  %14 = vst [vmem:[%s1 + $0x10] sm:$0xff] %v10
  %15 = vst [vmem:[%s1 + $0x18] sm:$0xff] %v11
  // Predicated region
  $region6: #{mock_model_forward.1} parent=0 // pred_check
    _
  $region7: #{mock_model_forward.1} parent=0 // pred_check_branch
    %17 = sbr.rel (0) target = $region9
  $region8: #{mock_model_forward.1} parent=0 // pred_region
    _
  $region9: #{mock_model_forward.1} parent=0 // pred_fallthru
    _
  // Predicated region
  $region10: #{mock_model_forward.1} parent=0 // pred_check
    _
  $region11: #{mock_model_forward.1} parent=0 // pred_check_branch
    %19 = sbr.rel (0) target = $region13
  $region12: #{mock_model_forward.1} parent=0 // pred_region
    _
  $region13: #{mock_model_forward.1} parent=0 // pred_fallthru
    _

</llo_original>
